<compile_context>
chip_gen: v7x
topology: tpu7x:2x2x1
jax: 0.10.0
libtpu: 0.0.40
codegen_flags: <defaults>
</compile_context>

<pallas_src>
import functools

import jax
import jax.numpy as jnp
from jax import lax
from jax.experimental import pallas as pl
from jax.experimental.pallas import tpu as pltpu


def _lstm_cell_kernel(x_ref, wih_ref, whh_ref, b_ref, wfc_ref, bfc_ref,
                      out_ref, xw_ref, *, batch, seq_len):
    """Whole forward in one invocation.

    x_ref   : (T*B, D)  time-major flattened input
    wih_ref : (D, 4H)   W_ih^T
    whh_ref : (H, 4H)   W_hh^T
    b_ref   : (1, 4H)   b_ih + b_hh
    wfc_ref : (1, H)    FC head weight row
    bfc_ref : (1, 1)    FC head bias
    out_ref : (B, 1)    sigmoid(logits)
    xw_ref  : (T*B, 4H) VMEM scratch for the hoisted input projection
    """
    B, T = batch, seq_len
    H = whh_ref.shape[0]

    # ---- Hoisted input projection: one MXU pass covers all T steps, bias folded in.
    xw_ref[...] = (jnp.dot(x_ref[...], wih_ref[...],
                           preferred_element_type=jnp.float32)
                   + b_ref[...])

    # ---- Serial recurrence: only h_prev @ W_hh^T is on the critical path.
    def step(t, carry):
        h_prev, c_prev = carry
        row = pl.multiple_of(t * B, B)
        gates = xw_ref[pl.ds(row, B), :] + jnp.dot(
            h_prev, whh_ref[...], preferred_element_type=jnp.float32)  # (B, 4H)

        # Full-width transcendentals on the EUP, then slice gate pieces (i, f, g, o).
        sig_all = jax.nn.sigmoid(gates)
        tanh_all = jnp.tanh(gates)
        i_g = sig_all[:, 0 * H:1 * H]
        f_g = sig_all[:, 1 * H:2 * H]
        g_g = tanh_all[:, 2 * H:3 * H]
        o_g = sig_all[:, 3 * H:4 * H]

        c_new = f_g * c_prev + i_g * g_g
        h_new = o_g * jnp.tanh(c_new)
        return (h_new, c_new)

    h0 = jnp.zeros((B, H), jnp.float32)
    c0 = jnp.zeros((B, H), jnp.float32)
    h_n, _ = lax.fori_loop(0, T, step, (h0, c0), unroll=True)

    # ---- 32 -> 1 head off the MXU: VPU multiply + lane reduce + sigmoid.
    logits = jnp.sum(h_n * wfc_ref[...], axis=-1, keepdims=True) + bfc_ref[...]
    out_ref[...] = jax.nn.sigmoid(logits)


@jax.jit
def lstm_cell_forward(x, w_ih, w_hh, b_ih, b_hh, w_fc, b_fc):
    """x: (B, T, D) float32. Returns probs: (B, 1) float32."""
    B, T, D = x.shape
    H = w_hh.shape[1]

    # Layout plumbing only (256 B): time-major + flattened so step t's rows of the
    # pre-projected gates are contiguous [t*B : (t+1)*B].
    x2d = jnp.transpose(x, (1, 0, 2)).reshape(T * B, D).astype(jnp.float32)
    wih_t = jnp.transpose(w_ih).astype(jnp.float32)      # (D, 4H)
    whh_t = jnp.transpose(w_hh).astype(jnp.float32)      # (H, 4H)
    b = (b_ih + b_hh).reshape(1, 4 * H).astype(jnp.float32)
    wfc = w_fc.reshape(1, H).astype(jnp.float32)         # (1, H) head row (stays off MXU)
    bfc = b_fc.reshape(1, 1).astype(jnp.float32)

    kernel = functools.partial(_lstm_cell_kernel, batch=B, seq_len=T)
    vmem = pl.BlockSpec(memory_space=pltpu.MemorySpace.VMEM)

    return pl.pallas_call(
        kernel,
        out_shape=jax.ShapeDtypeStruct((B, 1), jnp.float32),
        in_specs=[vmem, vmem, vmem, vmem, vmem, vmem],
        out_specs=vmem,
        scratch_shapes=[pltpu.VMEM((T * B, 4 * H), jnp.float32)],
    )(x2d, wih_t, whh_t, b, wfc, bfc)


def reference_forward(x, w_ih, w_hh, b_ih, b_hh, w_fc, b_fc):
    """Pure-JAX reference (mirrors torch nn.LSTM + Linear + Sigmoid)."""
    B, T, D = x.shape
    H = w_hh.shape[1]

    def step(carry, x_t):
        h, c = carry
        gates = x_t @ w_ih.T + h @ w_hh.T + b_ih + b_hh
        i = jax.nn.sigmoid(gates[:, 0 * H:1 * H])
        f = jax.nn.sigmoid(gates[:, 1 * H:2 * H])
        g = jnp.tanh(gates[:, 2 * H:3 * H])
        o = jax.nn.sigmoid(gates[:, 3 * H:4 * H])
        c = f * c + i * g
        h = o * jnp.tanh(c)
        return (h, c), None

    h0 = jnp.zeros((B, H), jnp.float32)
    c0 = jnp.zeros((B, H), jnp.float32)
    (h_n, _), _ = jax.lax.scan(step, (h0, c0), jnp.transpose(x, (1, 0, 2)))
    logits = h_n @ w_fc.T + b_fc
    return jax.nn.sigmoid(logits)


if __name__ == "__main__":
    # Module config implied by the forward pass: hidden_size must be 32
    # (because self.linear = nn.Linear(32, 1) consumes h_n[-1]).
    B, T, D, H = 2, 8, 4, 32
    key = jax.random.PRNGKey(0)
    keys = jax.random.split(key, 8)

    # Deterministic init, PyTorch-style uniform(-1/sqrt(H), 1/sqrt(H)).
    k = 1.0 / jnp.sqrt(jnp.float32(H))
    w_ih = jax.random.uniform(keys[0], (4 * H, D), jnp.float32, -k, k)
    w_hh = jax.random.uniform(keys[1], (4 * H, H), jnp.float32, -k, k)
    b_ih = jax.random.uniform(keys[2], (4 * H,), jnp.float32, -k, k)
    b_hh = jax.random.uniform(keys[3], (4 * H,), jnp.float32, -k, k)
    kf = 1.0 / jnp.sqrt(jnp.float32(32))
    w_fc = jax.random.uniform(keys[4], (1, 32), jnp.float32, -kf, kf)
    b_fc = jax.random.uniform(keys[5], (1,), jnp.float32, -kf, kf)

    x = jax.random.normal(keys[6], (B, T, D), jnp.float32)

    probs = lstm_cell_forward(x, w_ih, w_hh, b_ih, b_hh, w_fc, b_fc)
    probs = jax.block_until_ready(probs)

    ref = reference_forward(x, w_ih, w_hh, b_ih, b_hh, w_fc, b_fc)
    assert probs.shape == (B, 1)
    assert jnp.allclose(probs, ref, atol=1e-5, rtol=1e-5), (probs, ref)

    # NOTE: lstm2/lstm3/fc_1/relu/tanh/flatten are declared in __init__ but unused
    # in forward(); dropout(p=0.0) is identity. Gradient hooks are backward-only.
    print("KERNEL_OK")
</pallas_src>

<mosaic_0001>
module attributes {stable_mosaic.version = 11 : i64} {
  func.func @_lstm_cell_kernel(%arg0: memref<16x4xf32, #tpu.memory_space<vmem>>, %arg1: memref<4x128xf32, #tpu.memory_space<vmem>>, %arg2: memref<32x128xf32, #tpu.memory_space<vmem>>, %arg3: memref<1x128xf32, #tpu.memory_space<vmem>>, %arg4: memref<1x32xf32, #tpu.memory_space<vmem>>, %arg5: memref<1x1xf32, #tpu.memory_space<vmem>>, %arg6: memref<2x1xf32, #tpu.memory_space<vmem>>, %arg7: memref<16x128xf32, #tpu.memory_space<vmem>>) attributes {dimension_semantics = [], scalar_prefetch = 0 : i64, scratch_operands = 1 : i64, tpu.core_type = #tpu.core_type<tc>} {
    %c0 = arith.constant 0 : index
    %c0_0 = arith.constant 0 : index
    %0 = vector.load %arg0[%c0, %c0_0] : memref<16x4xf32, #tpu.memory_space<vmem>>, vector<16x4xf32>
    %c0_1 = arith.constant 0 : index
    %c0_2 = arith.constant 0 : index
    %1 = vector.load %arg1[%c0_1, %c0_2] : memref<4x128xf32, #tpu.memory_space<vmem>>, vector<4x128xf32>
    %cst = arith.constant dense<0.000000e+00> : vector<16x128xf32>
    %2 = tpu.matmul %0, %1, %cst {dimension_numbers = #tpu.dot_dimension_numbers<[1], [0], [0], [1], [0, 0, 1, 1], [], []>} : vector<16x4xf32>, vector<4x128xf32>, vector<16x128xf32> -> vector<16x128xf32>
    %c0_3 = arith.constant 0 : index
    %c0_4 = arith.constant 0 : index
    %3 = vector.load %arg3[%c0_3, %c0_4] : memref<1x128xf32, #tpu.memory_space<vmem>>, vector<1x128xf32>
    %4 = vector.broadcast %3 : vector<1x128xf32> to vector<16x128xf32>
    %5 = arith.addf %2, %4 : vector<16x128xf32>
    %c0_5 = arith.constant 0 : index
    %c0_6 = arith.constant 0 : index
    %6 = vector.load %arg7[%c0_5, %c0_6] : memref<16x128xf32, #tpu.memory_space<vmem>>, vector<16x128xf32>
    tpu.vector_store %arg7[%c0_5, %c0_6], %5 {strides = array<i32>} : memref<16x128xf32, #tpu.memory_space<vmem>>, vector<16x128xf32>,
    %cst_7 = arith.constant 0.000000e+00 : f32
    %7 = vector.broadcast %cst_7 : f32 to vector<2x32xf32>
    %cst_8 = arith.constant 0.000000e+00 : f32
    %8 = vector.broadcast %cst_8 : f32 to vector<2x32xf32>
    %c0_i32 = arith.constant 0 : i32
    %c2_i32 = arith.constant 2 : i32
    %9 = arith.muli %c0_i32, %c2_i32 : i32
    %10 = tpu.assume_multiple %9, 2 : i32
    %11 = arith.index_cast %10 : i32 to index
    %c0_9 = arith.constant 0 : index
    %12 = vector.load %arg7[%11, %c0_9] : memref<16x128xf32, #tpu.memory_space<vmem>>, vector<2x128xf32>
    %c0_10 = arith.constant 0 : index
    %c0_11 = arith.constant 0 : index
    %13 = vector.load %arg2[%c0_10, %c0_11] : memref<32x128xf32, #tpu.memory_space<vmem>>, vector<32x128xf32>
    %cst_12 = arith.constant dense<0.000000e+00> : vector<2x128xf32>
    %14 = tpu.matmul %7, %13, %cst_12 {dimension_numbers = #tpu.dot_dimension_numbers<[1], [0], [0], [1], [0, 0, 1, 1], [], []>} : vector<2x32xf32>, vector<32x128xf32>, vector<2x128xf32> -> vector<2x128xf32>
    %15 = arith.addf %12, %14 : vector<2x128xf32>
    %16 = arith.negf %15 : vector<2x128xf32>
    %17 = math.exp %16 : vector<2x128xf32>
    %cst_13 = arith.constant 1.000000e+00 : f32
    %18 = vector.broadcast %cst_13 : f32 to vector<2x128xf32>
    %19 = arith.addf %18, %17 : vector<2x128xf32>
    %20 = arith.divf %18, %19 : vector<2x128xf32>
    %21 = math.tanh %15 : vector<2x128xf32>
    %22 = vector.extract_strided_slice %20 {offsets = [0, 0], sizes = [2, 32], strides = [1, 1]} : vector<2x128xf32> to vector<2x32xf32>
    %23 = vector.extract_strided_slice %20 {offsets = [0, 32], sizes = [2, 32], strides = [1, 1]} : vector<2x128xf32> to vector<2x32xf32>
    %24 = vector.extract_strided_slice %21 {offsets = [0, 64], sizes = [2, 32], strides = [1, 1]} : vector<2x128xf32> to vector<2x32xf32>
    %25 = vector.extract_strided_slice %20 {offsets = [0, 96], sizes = [2, 32], strides = [1, 1]} : vector<2x128xf32> to vector<2x32xf32>
    %26 = arith.mulf %23, %8 : vector<2x32xf32>
    %27 = arith.mulf %22, %24 : vector<2x32xf32>
    %28 = arith.addf %26, %27 : vector<2x32xf32>
    %29 = math.tanh %28 : vector<2x32xf32>
    %30 = arith.mulf %25, %29 : vector<2x32xf32>
    %c1_i32 = arith.constant 1 : i32
    %c2_i32_14 = arith.constant 2 : i32
    %31 = arith.muli %c1_i32, %c2_i32_14 : i32
    %32 = tpu.assume_multiple %31, 2 : i32
    %33 = arith.index_cast %32 : i32 to index
    %c0_15 = arith.constant 0 : index
    %34 = vector.load %arg7[%33, %c0_15] : memref<16x128xf32, #tpu.memory_space<vmem>>, vector<2x128xf32>
    %c0_16 = arith.constant 0 : index
    %c0_17 = arith.constant 0 : index
    %35 = vector.load %arg2[%c0_16, %c0_17] : memref<32x128xf32, #tpu.memory_space<vmem>>, vector<32x128xf32>
    %cst_18 = arith.constant dense<0.000000e+00> : vector<2x128xf32>
    %36 = tpu.matmul %30, %35, %cst_18 {dimension_numbers = #tpu.dot_dimension_numbers<[1], [0], [0], [1], [0, 0, 1, 1], [], []>} : vector<2x32xf32>, vector<32x128xf32>, vector<2x128xf32> -> vector<2x128xf32>
    %37 = arith.addf %34, %36 : vector<2x128xf32>
    %38 = arith.negf %37 : vector<2x128xf32>
    %39 = math.exp %38 : vector<2x128xf32>
    %cst_19 = arith.constant 1.000000e+00 : f32
    %40 = vector.broadcast %cst_19 : f32 to vector<2x128xf32>
    %41 = arith.addf %40, %39 : vector<2x128xf32>
    %42 = arith.divf %40, %41 : vector<2x128xf32>
    %43 = math.tanh %37 : vector<2x128xf32>
    %44 = vector.extract_strided_slice %42 {offsets = [0, 0], sizes = [2, 32], strides = [1, 1]} : vector<2x128xf32> to vector<2x32xf32>
    %45 = vector.extract_strided_slice %42 {offsets = [0, 32], sizes = [2, 32], strides = [1, 1]} : vector<2x128xf32> to vector<2x32xf32>
    %46 = vector.extract_strided_slice %43 {offsets = [0, 64], sizes = [2, 32], strides = [1, 1]} : vector<2x128xf32> to vector<2x32xf32>
    %47 = vector.extract_strided_slice %42 {offsets = [0, 96], sizes = [2, 32], strides = [1, 1]} : vector<2x128xf32> to vector<2x32xf32>
    %48 = arith.mulf %45, %28 : vector<2x32xf32>
    %49 = arith.mulf %44, %46 : vector<2x32xf32>
    %50 = arith.addf %48, %49 : vector<2x32xf32>
    %51 = math.tanh %50 : vector<2x32xf32>
    %52 = arith.mulf %47, %51 : vector<2x32xf32>
    %c2_i32_20 = arith.constant 2 : i32
    %c2_i32_21 = arith.constant 2 : i32
    %53 = arith.muli %c2_i32_20, %c2_i32_21 : i32
    %54 = tpu.assume_multiple %53, 2 : i32
    %55 = arith.index_cast %54 : i32 to index
    %c0_22 = arith.constant 0 : index
    %56 = vector.load %arg7[%55, %c0_22] : memref<16x128xf32, #tpu.memory_space<vmem>>, vector<2x128xf32>
    %c0_23 = arith.constant 0 : index
    %c0_24 = arith.constant 0 : index
    %57 = vector.load %arg2[%c0_23, %c0_24] : memref<32x128xf32, #tpu.memory_space<vmem>>, vector<32x128xf32>
    %cst_25 = arith.constant dense<0.000000e+00> : vector<2x128xf32>
    %58 = tpu.matmul %52, %57, %cst_25 {dimension_numbers = #tpu.dot_dimension_numbers<[1], [0], [0], [1], [0, 0, 1, 1], [], []>} : vector<2x32xf32>, vector<32x128xf32>, vector<2x128xf32> -> vector<2x128xf32>
    %59 = arith.addf %56, %58 : vector<2x128xf32>
    %60 = arith.negf %59 : vector<2x128xf32>
    %61 = math.exp %60 : vector<2x128xf32>
    %cst_26 = arith.constant 1.000000e+00 : f32
    %62 = vector.broadcast %cst_26 : f32 to vector<2x128xf32>
    %63 = arith.addf %62, %61 : vector<2x128xf32>
    %64 = arith.divf %62, %63 : vector<2x128xf32>
    %65 = math.tanh %59 : vector<2x128xf32>
    %66 = vector.extract_strided_slice %64 {offsets = [0, 0], sizes = [2, 32], strides = [1, 1]} : vector<2x128xf32> to vector<2x32xf32>
    %67 = vector.extract_strided_slice %64 {offsets = [0, 32], sizes = [2, 32], strides = [1, 1]} : vector<2x128xf32> to vector<2x32xf32>
    %68 = vector.extract_strided_slice %65 {offsets = [0, 64], sizes = [2, 32], strides = [1, 1]} : vector<2x128xf32> to vector<2x32xf32>
    %69 = vector.extract_strided_slice %64 {offsets = [0, 96], sizes = [2, 32], strides = [1, 1]} : vector<2x128xf32> to vector<2x32xf32>
    %70 = arith.mulf %67, %50 : vector<2x32xf32>
    %71 = arith.mulf %66, %68 : vector<2x32xf32>
    %72 = arith.addf %70, %71 : vector<2x32xf32>
    %73 = math.tanh %72 : vector<2x32xf32>
    %74 = arith.mulf %69, %73 : vector<2x32xf32>
    %c3_i32 = arith.constant 3 : i32
    %c2_i32_27 = arith.constant 2 : i32
    %75 = arith.muli %c3_i32, %c2_i32_27 : i32
    %76 = tpu.assume_multiple %75, 2 : i32
    %77 = arith.index_cast %76 : i32 to index
    %c0_28 = arith.constant 0 : index
    %78 = vector.load %arg7[%77, %c0_28] : memref<16x128xf32, #tpu.memory_space<vmem>>, vector<2x128xf32>
    %c0_29 = arith.constant 0 : index
    %c0_30 = arith.constant 0 : index
    %79 = vector.load %arg2[%c0_29, %c0_30] : memref<32x128xf32, #tpu.memory_space<vmem>>, vector<32x128xf32>
    %cst_31 = arith.constant dense<0.000000e+00> : vector<2x128xf32>
    %80 = tpu.matmul %74, %79, %cst_31 {dimension_numbers = #tpu.dot_dimension_numbers<[1], [0], [0], [1], [0, 0, 1, 1], [], []>} : vector<2x32xf32>, vector<32x128xf32>, vector<2x128xf32> -> vector<2x128xf32>
    %81 = arith.addf %78, %80 : vector<2x128xf32>
    %82 = arith.negf %81 : vector<2x128xf32>
    %83 = math.exp %82 : vector<2x128xf32>
    %cst_32 = arith.constant 1.000000e+00 : f32
    %84 = vector.broadcast %cst_32 : f32 to vector<2x128xf32>
    %85 = arith.addf %84, %83 : vector<2x128xf32>
    %86 = arith.divf %84, %85 : vector<2x128xf32>
    %87 = math.tanh %81 : vector<2x128xf32>
    %88 = vector.extract_strided_slice %86 {offsets = [0, 0], sizes = [2, 32], strides = [1, 1]} : vector<2x128xf32> to vector<2x32xf32>
    %89 = vector.extract_strided_slice %86 {offsets = [0, 32], sizes = [2, 32], strides = [1, 1]} : vector<2x128xf32> to vector<2x32xf32>
    %90 = vector.extract_strided_slice %87 {offsets = [0, 64], sizes = [2, 32], strides = [1, 1]} : vector<2x128xf32> to vector<2x32xf32>
    %91 = vector.extract_strided_slice %86 {offsets = [0, 96], sizes = [2, 32], strides = [1, 1]} : vector<2x128xf32> to vector<2x32xf32>
    %92 = arith.mulf %89, %72 : vector<2x32xf32>
    %93 = arith.mulf %88, %90 : vector<2x32xf32>
    %94 = arith.addf %92, %93 : vector<2x32xf32>
    %95 = math.tanh %94 : vector<2x32xf32>
    %96 = arith.mulf %91, %95 : vector<2x32xf32>
    %c4_i32 = arith.constant 4 : i32
    %c2_i32_33 = arith.constant 2 : i32
    %97 = arith.muli %c4_i32, %c2_i32_33 : i32
    %98 = tpu.assume_multiple %97, 2 : i32
    %99 = arith.index_cast %98 : i32 to index
    %c0_34 = arith.constant 0 : index
    %100 = vector.load %arg7[%99, %c0_34] : memref<16x128xf32, #tpu.memory_space<vmem>>, vector<2x128xf32>
    %c0_35 = arith.constant 0 : index
    %c0_36 = arith.constant 0 : index
    %101 = vector.load %arg2[%c0_35, %c0_36] : memref<32x128xf32, #tpu.memory_space<vmem>>, vector<32x128xf32>
    %cst_37 = arith.constant dense<0.000000e+00> : vector<2x128xf32>
    %102 = tpu.matmul %96, %101, %cst_37 {dimension_numbers = #tpu.dot_dimension_numbers<[1], [0], [0], [1], [0, 0, 1, 1], [], []>} : vector<2x32xf32>, vector<32x128xf32>, vector<2x128xf32> -> vector<2x128xf32>
    %103 = arith.addf %100, %102 : vector<2x128xf32>
    %104 = arith.negf %103 : vector<2x128xf32>
    %105 = math.exp %104 : vector<2x128xf32>
    %cst_38 = arith.constant 1.000000e+00 : f32
    %106 = vector.broadcast %cst_38 : f32 to vector<2x128xf32>
    %107 = arith.addf %106, %105 : vector<2x128xf32>
    %108 = arith.divf %106, %107 : vector<2x128xf32>
    %109 = math.tanh %103 : vector<2x128xf32>
    %110 = vector.extract_strided_slice %108 {offsets = [0, 0], sizes = [2, 32], strides = [1, 1]} : vector<2x128xf32> to vector<2x32xf32>
    %111 = vector.extract_strided_slice %108 {offsets = [0, 32], sizes = [2, 32], strides = [1, 1]} : vector<2x128xf32> to vector<2x32xf32>
    %112 = vector.extract_strided_slice %109 {offsets = [0, 64], sizes = [2, 32], strides = [1, 1]} : vector<2x128xf32> to vector<2x32xf32>
    %113 = vector.extract_strided_slice %108 {offsets = [0, 96], sizes = [2, 32], strides = [1, 1]} : vector<2x128xf32> to vector<2x32xf32>
    %114 = arith.mulf %111, %94 : vector<2x32xf32>
    %115 = arith.mulf %110, %112 : vector<2x32xf32>
    %116 = arith.addf %114, %115 : vector<2x32xf32>
    %117 = math.tanh %116 : vector<2x32xf32>
    %118 = arith.mulf %113, %117 : vector<2x32xf32>
    %c5_i32 = arith.constant 5 : i32
    %c2_i32_39 = arith.constant 2 : i32
    %119 = arith.muli %c5_i32, %c2_i32_39 : i32
    %120 = tpu.assume_multiple %119, 2 : i32
    %121 = arith.index_cast %120 : i32 to index
    %c0_40 = arith.constant 0 : index
    %122 = vector.load %arg7[%121, %c0_40] : memref<16x128xf32, #tpu.memory_space<vmem>>, vector<2x128xf32>
    %c0_41 = arith.constant 0 : index
    %c0_42 = arith.constant 0 : index
    %123 = vector.load %arg2[%c0_41, %c0_42] : memref<32x128xf32, #tpu.memory_space<vmem>>, vector<32x128xf32>
    %cst_43 = arith.constant dense<0.000000e+00> : vector<2x128xf32>
    %124 = tpu.matmul %118, %123, %cst_43 {dimension_numbers = #tpu.dot_dimension_numbers<[1], [0], [0], [1], [0, 0, 1, 1], [], []>} : vector<2x32xf32>, vector<32x128xf32>, vector<2x128xf32> -> vector<2x128xf32>
    %125 = arith.addf %122, %124 : vector<2x128xf32>
    %126 = arith.negf %125 : vector<2x128xf32>
    %127 = math.exp %126 : vector<2x128xf32>
    %cst_44 = arith.constant 1.000000e+00 : f32
    %128 = vector.broadcast %cst_44 : f32 to vector<2x128xf32>
    %129 = arith.addf %128, %127 : vector<2x128xf32>
    %130 = arith.divf %128, %129 : vector<2x128xf32>
    %131 = math.tanh %125 : vector<2x128xf32>
    %132 = vector.extract_strided_slice %130 {offsets = [0, 0], sizes = [2, 32], strides = [1, 1]} : vector<2x128xf32> to vector<2x32xf32>
    %133 = vector.extract_strided_slice %130 {offsets = [0, 32], sizes = [2, 32], strides = [1, 1]} : vector<2x128xf32> to vector<2x32xf32>
    %134 = vector.extract_strided_slice %131 {offsets = [0, 64], sizes = [2, 32], strides = [1, 1]} : vector<2x128xf32> to vector<2x32xf32>
    %135 = vector.extract_strided_slice %130 {offsets = [0, 96], sizes = [2, 32], strides = [1, 1]} : vector<2x128xf32> to vector<2x32xf32>
    %136 = arith.mulf %133, %116 : vector<2x32xf32>
    %137 = arith.mulf %132, %134 : vector<2x32xf32>
    %138 = arith.addf %136, %137 : vector<2x32xf32>
    %139 = math.tanh %138 : vector<2x32xf32>
    %140 = arith.mulf %135, %139 : vector<2x32xf32>
    %c6_i32 = arith.constant 6 : i32
    %c2_i32_45 = arith.constant 2 : i32
    %141 = arith.muli %c6_i32, %c2_i32_45 : i32
    %142 = tpu.assume_multiple %141, 2 : i32
    %143 = arith.index_cast %142 : i32 to index
    %c0_46 = arith.constant 0 : index
    %144 = vector.load %arg7[%143, %c0_46] : memref<16x128xf32, #tpu.memory_space<vmem>>, vector<2x128xf32>
    %c0_47 = arith.constant 0 : index
    %c0_48 = arith.constant 0 : index
    %145 = vector.load %arg2[%c0_47, %c0_48] : memref<32x128xf32, #tpu.memory_space<vmem>>, vector<32x128xf32>
    %cst_49 = arith.constant dense<0.000000e+00> : vector<2x128xf32>
    %146 = tpu.matmul %140, %145, %cst_49 {dimension_numbers = #tpu.dot_dimension_numbers<[1], [0], [0], [1], [0, 0, 1, 1], [], []>} : vector<2x32xf32>, vector<32x128xf32>, vector<2x128xf32> -> vector<2x128xf32>
    %147 = arith.addf %144, %146 : vector<2x128xf32>
    %148 = arith.negf %147 : vector<2x128xf32>
    %149 = math.exp %148 : vector<2x128xf32>
    %cst_50 = arith.constant 1.000000e+00 : f32
    %150 = vector.broadcast %cst_50 : f32 to vector<2x128xf32>
    %151 = arith.addf %150, %149 : vector<2x128xf32>
    %152 = arith.divf %150, %151 : vector<2x128xf32>
    %153 = math.tanh %147 : vector<2x128xf32>
    %154 = vector.extract_strided_slice %152 {offsets = [0, 0], sizes = [2, 32], strides = [1, 1]} : vector<2x128xf32> to vector<2x32xf32>
    %155 = vector.extract_strided_slice %152 {offsets = [0, 32], sizes = [2, 32], strides = [1, 1]} : vector<2x128xf32> to vector<2x32xf32>
    %156 = vector.extract_strided_slice %153 {offsets = [0, 64], sizes = [2, 32], strides = [1, 1]} : vector<2x128xf32> to vector<2x32xf32>
    %157 = vector.extract_strided_slice %152 {offsets = [0, 96], sizes = [2, 32], strides = [1, 1]} : vector<2x128xf32> to vector<2x32xf32>
    %158 = arith.mulf %155, %138 : vector<2x32xf32>
    %159 = arith.mulf %154, %156 : vector<2x32xf32>
    %160 = arith.addf %158, %159 : vector<2x32xf32>
    %161 = math.tanh %160 : vector<2x32xf32>
    %162 = arith.mulf %157, %161 : vector<2x32xf32>
    %c7_i32 = arith.constant 7 : i32
    %c2_i32_51 = arith.constant 2 : i32
    %163 = arith.muli %c7_i32, %c2_i32_51 : i32
    %164 = tpu.assume_multiple %163, 2 : i32
    %165 = arith.index_cast %164 : i32 to index
    %c0_52 = arith.constant 0 : index
    %166 = vector.load %arg7[%165, %c0_52] : memref<16x128xf32, #tpu.memory_space<vmem>>, vector<2x128xf32>
    %c0_53 = arith.constant 0 : index
    %c0_54 = arith.constant 0 : index
    %167 = vector.load %arg2[%c0_53, %c0_54] : memref<32x128xf32, #tpu.memory_space<vmem>>, vector<32x128xf32>
    %cst_55 = arith.constant dense<0.000000e+00> : vector<2x128xf32>
    %168 = tpu.matmul %162, %167, %cst_55 {dimension_numbers = #tpu.dot_dimension_numbers<[1], [0], [0], [1], [0, 0, 1, 1], [], []>} : vector<2x32xf32>, vector<32x128xf32>, vector<2x128xf32> -> vector<2x128xf32>
    %169 = arith.addf %166, %168 : vector<2x128xf32>
    %170 = arith.negf %169 : vector<2x128xf32>
    %171 = math.exp %170 : vector<2x128xf32>
    %cst_56 = arith.constant 1.000000e+00 : f32
    %172 = vector.broadcast %cst_56 : f32 to vector<2x128xf32>
    %173 = arith.addf %172, %171 : vector<2x128xf32>
    %174 = arith.divf %172, %173 : vector<2x128xf32>
    %175 = math.tanh %169 : vector<2x128xf32>
    %176 = vector.extract_strided_slice %174 {offsets = [0, 0], sizes = [2, 32], strides = [1, 1]} : vector<2x128xf32> to vector<2x32xf32>
    %177 = vector.extract_strided_slice %174 {offsets = [0, 32], sizes = [2, 32], strides = [1, 1]} : vector<2x128xf32> to vector<2x32xf32>
    %178 = vector.extract_strided_slice %175 {offsets = [0, 64], sizes = [2, 32], strides = [1, 1]} : vector<2x128xf32> to vector<2x32xf32>
    %179 = vector.extract_strided_slice %174 {offsets = [0, 96], sizes = [2, 32], strides = [1, 1]} : vector<2x128xf32> to vector<2x32xf32>
    %180 = arith.mulf %177, %160 : vector<2x32xf32>
    %181 = arith.mulf %176, %178 : vector<2x32xf32>
    %182 = arith.addf %180, %181 : vector<2x32xf32>
    %183 = math.tanh %182 : vector<2x32xf32>
    %184 = arith.mulf %179, %183 : vector<2x32xf32>
    %c8_i32 = arith.constant 8 : i32
    %c0_57 = arith.constant 0 : index
    %c0_58 = arith.constant 0 : index
    %185 = vector.load %arg4[%c0_57, %c0_58] : memref<1x32xf32, #tpu.memory_space<vmem>>, vector<1x32xf32>
    %186 = vector.broadcast %185 : vector<1x32xf32> to vector<2x32xf32>
    %187 = arith.mulf %184, %186 : vector<2x32xf32>
    %cst_59 = arith.constant dense<0.000000e+00> : vector<2xf32>
    %188 = vector.multi_reduction <add>, %187, %cst_59 [1] : vector<2x32xf32> to vector<2xf32>
    %189 = vector.shape_cast %188 : vector<2xf32> to vector<2x1xf32>
    %c0_60 = arith.constant 0 : index
    %c0_61 = arith.constant 0 : index
    %190 = vector.load %arg5[%c0_60, %c0_61] : memref<1x1xf32, #tpu.memory_space<vmem>>, vector<1x1xf32>
    %191 = vector.broadcast %190 : vector<1x1xf32> to vector<2x1xf32>
    %192 = arith.addf %189, %191 : vector<2x1xf32>
    %193 = arith.negf %192 : vector<2x1xf32>
    %194 = math.exp %193 : vector<2x1xf32>
    %cst_62 = arith.constant 1.000000e+00 : f32
    %195 = vector.broadcast %cst_62 : f32 to vector<2x1xf32>
    %196 = arith.addf %195, %194 : vector<2x1xf32>
    %197 = arith.divf %195, %196 : vector<2x1xf32>
    %c0_63 = arith.constant 0 : index
    %c0_64 = arith.constant 0 : index
    %198 = vector.load %arg6[%c0_63, %c0_64] : memref<2x1xf32, #tpu.memory_space<vmem>>, vector<2x1xf32>
    tpu.vector_store %arg6[%c0_63, %c0_64], %197 {strides = array<i32>} : memref<2x1xf32, #tpu.memory_space<vmem>>, vector<2x1xf32>,
    return
  }
}

</mosaic_0001>

<llo_original>
// kernel: lstm_cell_forward.1
$region0: #{lstm_cell_forward.1}
  #allocation0 [shape = 'u32[]', space=smem, size = 0x4, offset = 0x4, fixed_abs, tag = 'smem constant byte address 0x4 - core index']
  #allocation1 [shape = 'u32[144,128]{1,0:T(1,128)}', space=vmem, size = 0x12000, scoped, tag = 'internal scratch']
  #allocation2 [shape = 'f32[16,128]{1,0:T(8,128)}', space=vmem, size = 0x2000, scoped, tag = 'scratch operand']
  #allocation3 [shape = 'f32[1,1]{1,0:T(1,128)S(1)}', space=vmem, size = 0x200, scoped, tag = 'scoped memory for lstm_cell_forward.1']
  %s0 = inlined_call_operand.vmem [shape: f32[16,4], index: 0, kind: input, shape index: {}]
  %s1 = inlined_call_operand.vmem [shape: f32[4,128], index: 1, kind: input, shape index: {}]
  %s2 = inlined_call_operand.vmem [shape: f32[32,128], index: 2, kind: input, shape index: {}]
  %s3 = inlined_call_operand.vmem [shape: f32[1,128], index: 3, kind: input, shape index: {}]
  %s4 = inlined_call_operand.vmem [shape: f32[1,32], index: 4, kind: input, shape index: {}]
  %s5 = inlined_call_operand.<no memory space> [shape: f32[1,1], index: 5, kind: input, shape index: {}]
  %s6 = inlined_call_operand.vmem [shape: f32[2,1], index: 6, kind: output, shape index: {}]
  %s7 = sld [smem:[#allocation0]]
  $region34: #{lstm_cell_forward.1} parent=0
    _
  %s9 = ssub.s32 1, %s7
  %s10 = scalar_select 0, %s9, %s7
  %v11 = vstv %s5
  %12 = vst [vmem:[#allocation3] sm:$0x1] %v11
  // Predicated region
  $region2: #{lstm_cell_forward.1} parent=0 // pred_check
    _
  $region3: #{lstm_cell_forward.1} parent=0 // pred_check_branch
    %14 = sbr.rel (0) target = $region5
  $region4: #{lstm_cell_forward.1} parent=0 // pred_region
    _
  $region5: #{lstm_cell_forward.1} parent=0 // pred_fallthru
    _
  // Predicated region
  $region6: #{lstm_cell_forward.1} parent=0 // pred_check
    _
  $region7: #{lstm_cell_forward.1} parent=0 // pred_check_branch
    %16 = sbr.rel (0) target = $region9
  $region8: #{lstm_cell_forward.1} parent=0 // pred_region
    _
  $region9: #{lstm_cell_forward.1} parent=0 // pred_fallthru
    _
  // Predicated region
  $region10: #{lstm_cell_forward.1} parent=0 // pred_check
    _
  $region11: #{lstm_cell_forward.1} parent=0 // pred_check_branch
    %18 = sbr.rel (0) target = $region13
  $region12: #{lstm_cell_forward.1} parent=0 // pred_region
    _
  $region13: #{lstm_cell_forward.1} parent=0 // pred_fallthru
    _
  // Predicated region
  $region14: #{lstm_cell_forward.1} parent=0 // pred_check
    _
  $region15: #{lstm_cell_forward.1} parent=0 // pred_check_branch
    %20 = sbr.rel (0) target = $region17
  $region16: #{lstm_cell_forward.1} parent=0 // pred_region
    _
  $region17: #{lstm_cell_forward.1} parent=0 // pred_fallthru
    _
  // Predicated region
  $region18: #{lstm_cell_forward.1} parent=0 // pred_check
    _
  $region19: #{lstm_cell_forward.1} parent=0 // pred_check_branch
    %22 = sbr.rel (0) target = $region21
  $region20: #{lstm_cell_forward.1} parent=0 // pred_region
    _
  $region21: #{lstm_cell_forward.1} parent=0 // pred_fallthru
    _
  // Predicated region
  $region22: #{lstm_cell_forward.1} parent=0 // pred_check
    _
  $region23: #{lstm_cell_forward.1} parent=0 // pred_check_branch
    %24 = sbr.rel (0) target = $region25
  $region24: #{lstm_cell_forward.1} parent=0 // pred_region
    _
  $region25: #{lstm_cell_forward.1} parent=0 // pred_fallthru
    _
  %v25 = vld [vmem:[%s0] sm:$0xff]
  %v26 = vld [vmem:[%s0 + $0x8] sm:$0xff]
  %v27 = vld [vmem:[%s1] sm:$0xf]
  %v28 = vld [vmem:[%s3] sm:$0x1]
  %v30 = vlaneseq
  %v31 = vshrl.u32 %v30, 7
  %v32 = vsub.s32 0, %v31
  %v33 = vrot.slane %v28, %v32
  %vm35 = vcmask 31744
  %v37 = vsel %vm35, %v25, 0
  %v40 = vsel %vm35, %v26, 0
  %vm42 = vcmask 1043456
  %v44 = vsel %vm42, %v27, 0
  %46 = vmatprep.subr.mxu0 0.0
  %47 = vmatpush1.msra.mxu0 %v44
  %48 = vmatprep.subr.mxu0 0.0
  %49 = vmatpush1.msra.mxu0 0.0
  %50 = vmatprep.subr.mxu0 0.0
  %51 = vmatpush1.msra.mxu0 0.0
  %52 = vmatprep.subr.mxu0 0.0
  %53 = vmatpush1.msra.mxu0 0.0
  %54 = vmatprep.subr.mxu0 0.0
  %55 = vmatpush1.msra.mxu0 0.0
  %56 = vmatprep.subr.mxu0 0.0
  %57 = vmatpush1.msra.mxu0 0.0
  %58 = vmatprep.subr.mxu0 0.0
  %59 = vmatpush1.msra.mxu0 0.0
  %60 = vmatprep.subr.mxu0 0.0
  %61 = vmatpush1.msra.mxu0 0.0
  %62 = vmatprep.subr.mxu0 0.0
  %63 = vmatpush1.msra.mxu0 0.0
  %64 = vmatprep.subr.mxu0 0.0
  %65 = vmatpush1.msra.mxu0 0.0
  %66 = vmatprep.subr.mxu0 0.0
  %67 = vmatpush1.msra.mxu0 0.0
  %68 = vmatprep.subr.mxu0 0.0
  %69 = vmatpush1.msra.mxu0 0.0
  %70 = vmatprep.subr.mxu0 0.0
  %71 = vmatpush1.msra.mxu0 0.0
  %72 = vmatprep.subr.mxu0 0.0
  %73 = vmatpush1.msra.mxu0 0.0
  %74 = vmatprep.subr.mxu0 0.0
  %75 = vmatpush1.msra.mxu0 0.0
  %76 = vmatprep.subr.mxu0 0.0
  %77 = vmatpush1.msra.mxu0 0.0
  %78 = vmatprep.subr.mxu0 0.0
  %79 = vmatpush1.msra.mxu0 0.0
  %80 = vmatprep.subr.mxu0 0.0
  %81 = vmatpush1.msra.mxu0 0.0
  %82 = vmatprep.subr.mxu0 0.0
  %83 = vmatpush1.msra.mxu0 0.0
  %84 = vmatprep.subr.mxu0 0.0
  %85 = vmatpush1.msra.mxu0 0.0
  %86 = vmatprep.subr.mxu0 0.0
  %87 = vmatpush1.msra.mxu0 0.0
  %88 = vmatprep.subr.mxu0 0.0
  %89 = vmatpush1.msra.mxu0 0.0
  %90 = vmatprep.subr.mxu0 0.0
  %91 = vmatpush1.msra.mxu0 0.0
  %92 = vmatprep.subr.mxu0 0.0
  %93 = vmatpush1.msra.mxu0 0.0
  %94 = vmatprep.subr.mxu0 0.0
  %95 = vmatpush1.msra.mxu0 0.0
  %96 = vmatprep.subr.mxu0 0.0
  %97 = vmatpush1.msra.mxu0 0.0
  %98 = vmatprep.subr.mxu0 0.0
  %99 = vmatpush1.msra.mxu0 0.0
  %100 = vmatprep.subr.mxu0 0.0
  %101 = vmatpush1.msra.mxu0 0.0
  %102 = vmatprep.subr.mxu0 0.0
  %103 = vmatpush1.msra.mxu0 0.0
  %104 = vmatprep.subr.mxu0 0.0
  %105 = vmatpush1.msra.mxu0 0.0
  %106 = vmatprep.subr.mxu0 0.0
  %107 = vmatpush1.msra.mxu0 0.0
  %108 = vmatprep.subr.mxu0 0.0
  %109 = vmatpush1.msra.mxu0 0.0
  %110 = vmatprep.mubr.f32.mxu0 0.0
  %111 = vmatmul.mubr.f32.gmra.mrb[0].mxu0 %v37
  %v112 = vpop.f32.mrb[0].mxu0
  %v113 = vadd.f32 %v33, %v112
  %v114 = vpop.f32.mrb[0].mxu0
  %115 = vmatprep.mubr.f32.mxu0 0.0
  %116 = vmatmul.mubr.f32.gmra.mrb[0].mxu0 %v40
  %v117 = vpop.f32.mrb[0].mxu0
  %v118 = vadd.f32 %v33, %v117
  %v119 = vpop.f32.mrb[0].mxu0
  %120 = vdwg.mxu0
  %121 = vst [vmem:[#allocation2] sm:$0xff] %v113
  %122 = vst [vmem:[#allocation2 + $0x8] sm:$0xff] %v118
  %v123 = vld [vmem:[#allocation2] sm:$0x3]
  %v124 = vld [vmem:[%s2] sm:$0xff]
  %v125 = vld [vmem:[%s2 + $0x8] sm:$0xff]
  %v126 = vld [vmem:[%s2 + $0x10] sm:$0xff]
  %v127 = vld [vmem:[%s2 + $0x18] sm:$0xff]
  %vm128 = vcmask 261120
  %v130 = vsel %vm128, 0.0, 0
  %132 = vmatprep.subr.mxu0 0.0
  %133 = vmatpush1.msra.mxu0 %v124
  %134 = vmatprep.subr.mxu0 0.0
  %135 = vmatpush1.msra.mxu0 %v125
  %136 = vmatprep.subr.mxu0 0.0
  %137 = vmatpush1.msra.mxu0 %v126
  %138 = vmatprep.subr.mxu0 0.0
  %139 = vmatpush1.msra.mxu0 %v127
  %140 = vmatprep.subr.mxu0 0.0
  %141 = vmatpush1.msra.mxu0 0.0
  %142 = vmatprep.subr.mxu0 0.0
  %143 = vmatpush1.msra.mxu0 0.0
  %144 = vmatprep.subr.mxu0 0.0
  %145 = vmatpush1.msra.mxu0 0.0
  %146 = vmatprep.subr.mxu0 0.0
  %147 = vmatpush1.msra.mxu0 0.0
  %148 = vmatprep.subr.mxu0 0.0
  %149 = vmatpush1.msra.mxu0 0.0
  %150 = vmatprep.subr.mxu0 0.0
  %151 = vmatpush1.msra.mxu0 0.0
  %152 = vmatprep.subr.mxu0 0.0
  %153 = vmatpush1.msra.mxu0 0.0
  %154 = vmatprep.subr.mxu0 0.0
  %155 = vmatpush1.msra.mxu0 0.0
  %156 = vmatprep.subr.mxu0 0.0
  %157 = vmatpush1.msra.mxu0 0.0
  %158 = vmatprep.subr.mxu0 0.0
  %159 = vmatpush1.msra.mxu0 0.0
  %160 = vmatprep.subr.mxu0 0.0
  %161 = vmatpush1.msra.mxu0 0.0
  %162 = vmatprep.subr.mxu0 0.0
  %163 = vmatpush1.msra.mxu0 0.0
  %164 = vmatprep.subr.mxu0 0.0
  %165 = vmatpush1.msra.mxu0 0.0
  %166 = vmatprep.subr.mxu0 0.0
  %167 = vmatpush1.msra.mxu0 0.0
  %168 = vmatprep.subr.mxu0 0.0
  %169 = vmatpush1.msra.mxu0 0.0
  %170 = vmatprep.subr.mxu0 0.0
  %171 = vmatpush1.msra.mxu0 0.0
  %172 = vmatprep.subr.mxu0 0.0
  %173 = vmatpush1.msra.mxu0 0.0
  %174 = vmatprep.subr.mxu0 0.0
  %175 = vmatpush1.msra.mxu0 0.0
  %176 = vmatprep.subr.mxu0 0.0
  %177 = vmatpush1.msra.mxu0 0.0
  %178 = vmatprep.subr.mxu0 0.0
  %179 = vmatpush1.msra.mxu0 0.0
  %180 = vmatprep.subr.mxu0 0.0
  %181 = vmatpush1.msra.mxu0 0.0
  %182 = vmatprep.subr.mxu0 0.0
  %183 = vmatpush1.msra.mxu0 0.0
  %184 = vmatprep.subr.mxu0 0.0
  %185 = vmatpush1.msra.mxu0 0.0
  %186 = vmatprep.subr.mxu0 0.0
  %187 = vmatpush1.msra.mxu0 0.0
  %188 = vmatprep.subr.mxu0 0.0
  %189 = vmatpush1.msra.mxu0 0.0
  %190 = vmatprep.subr.mxu0 0.0
  %191 = vmatpush1.msra.mxu0 0.0
  %192 = vmatprep.subr.mxu0 0.0
  %193 = vmatpush1.msra.mxu0 0.0
  %194 = vmatprep.subr.mxu0 0.0
  %195 = vmatpush1.msra.mxu0 0.0
  %196 = vmatprep.mubr.f32.mxu0 0.0
  %197 = vmatmul.mubr.f32.gmra.mrb[0].mxu0 %v130
  %v198 = vpop.f32.mrb[0].mxu0
  %v199 = vadd.f32 0.0, %v198
  %v200 = vpop.f32.mrb[0].mxu0
  %201 = vdwg.mxu0
  %v202 = vadd.f32 %v123, %v199
  %v203 = vxor.u32 %v202, 2147483648
  %v204 = vmul.f32 %v203, 1.442695
  %v205 = vpow.pop %v204
  %v206 = vadd.f32 %v205, 1.0
  %v207 = vrcp.pop %v206
  %v208 = vmul.f32 1.0, %v207
  %v209 = vtanh.pop %v202
  %v210 = vmul.f32 %v208, 0.0
  %212 = vrot.lane.b32.xlu0 %v209, 64
  %v213 = vpop.permute.xlu0 %212
  %v215 = vmul.f32 %v208, %v213
  %217 = vrot.lane.b32.xlu0 %v215, 32
  %v218 = vpop.permute.xlu0 %217
  %v220 = vadd.f32 %v210, %v218
  %v221 = vtanh.pop %v220
  %223 = vrot.lane.b32.xlu0 %v221, 64
  %v224 = vpop.permute.xlu0 %223
  %v226 = vmul.f32 %v208, %v224
  %s227 = scalar_lea.vmem [#allocation2], 2
  %v228 = vld [vmem:[%s227] sm:$0x3]
  %230 = vrot.lane.b32.xlu0 %v226, 32
  %v231 = vpop.permute.xlu0 %230
  %v232 = vsel %vm128, %v231, 0
  %234 = vmatprep.subr.mxu0 0.0
  %235 = vmatpush1.msra.mxu0 %v124
  %236 = vmatprep.subr.mxu0 0.0
  %237 = vmatpush1.msra.mxu0 %v125
  %238 = vmatprep.subr.mxu0 0.0
  %239 = vmatpush1.msra.mxu0 %v126
  %240 = vmatprep.subr.mxu0 0.0
  %241 = vmatpush1.msra.mxu0 %v127
  %242 = vmatprep.subr.mxu0 0.0
  %243 = vmatpush1.msra.mxu0 0.0
  %244 = vmatprep.subr.mxu0 0.0
  %245 = vmatpush1.msra.mxu0 0.0
  %246 = vmatprep.subr.mxu0 0.0
  %247 = vmatpush1.msra.mxu0 0.0
  %248 = vmatprep.subr.mxu0 0.0
  %249 = vmatpush1.msra.mxu0 0.0
  %250 = vmatprep.subr.mxu0 0.0
  %251 = vmatpush1.msra.mxu0 0.0
  %252 = vmatprep.subr.mxu0 0.0
  %253 = vmatpush1.msra.mxu0 0.0
  %254 = vmatprep.subr.mxu0 0.0
  %255 = vmatpush1.msra.mxu0 0.0
  %256 = vmatprep.subr.mxu0 0.0
  %257 = vmatpush1.msra.mxu0 0.0
  %258 = vmatprep.subr.mxu0 0.0
  %259 = vmatpush1.msra.mxu0 0.0
  %260 = vmatprep.subr.mxu0 0.0
  %261 = vmatpush1.msra.mxu0 0.0
  %262 = vmatprep.subr.mxu0 0.0
  %263 = vmatpush1.msra.mxu0 0.0
  %264 = vmatprep.subr.mxu0 0.0
  %265 = vmatpush1.msra.mxu0 0.0
  %266 = vmatprep.subr.mxu0 0.0
  %267 = vmatpush1.msra.mxu0 0.0
  %268 = vmatprep.subr.mxu0 0.0
  %269 = vmatpush1.msra.mxu0 0.0
  %270 = vmatprep.subr.mxu0 0.0
  %271 = vmatpush1.msra.mxu0 0.0
  %272 = vmatprep.subr.mxu0 0.0
  %273 = vmatpush1.msra.mxu0 0.0
  %274 = vmatprep.subr.mxu0 0.0
  %275 = vmatpush1.msra.mxu0 0.0
  %276 = vmatprep.subr.mxu0 0.0
  %277 = vmatpush1.msra.mxu0 0.0
  %278 = vmatprep.subr.mxu0 0.0
  %279 = vmatpush1.msra.mxu0 0.0
  %280 = vmatprep.subr.mxu0 0.0
  %281 = vmatpush1.msra.mxu0 0.0
  %282 = vmatprep.subr.mxu0 0.0
  %283 = vmatpush1.msra.mxu0 0.0
  %284 = vmatprep.subr.mxu0 0.0
  %285 = vmatpush1.msra.mxu0 0.0
  %286 = vmatprep.subr.mxu0 0.0
  %287 = vmatpush1.msra.mxu0 0.0
  %288 = vmatprep.subr.mxu0 0.0
  %289 = vmatpush1.msra.mxu0 0.0
  %290 = vmatprep.subr.mxu0 0.0
  %291 = vmatpush1.msra.mxu0 0.0
  %292 = vmatprep.subr.mxu0 0.0
  %293 = vmatpush1.msra.mxu0 0.0
  %294 = vmatprep.subr.mxu0 0.0
  %295 = vmatpush1.msra.mxu0 0.0
  %296 = vmatprep.subr.mxu0 0.0
  %297 = vmatpush1.msra.mxu0 0.0
  %298 = vmatprep.mubr.f32.mxu0 0.0
  %299 = vmatmul.mubr.f32.gmra.mrb[0].mxu0 %v232
  %v300 = vpop.f32.mrb[0].mxu0
  %v301 = vadd.f32 0.0, %v300
  %v302 = vpop.f32.mrb[0].mxu0
  %303 = vdwg.mxu0
  %v304 = vadd.f32 %v228, %v301
  %v305 = vxor.u32 %v304, 2147483648
  %v306 = vmul.f32 %v305, 1.442695
  %v307 = vpow.pop %v306
  %v308 = vadd.f32 %v307, 1.0
  %v309 = vrcp.pop %v308
  %v310 = vmul.f32 1.0, %v309
  %v311 = vtanh.pop %v304
  %v312 = vmul.f32 %v310, %v220
  %314 = vrot.lane.b32.xlu0 %v311, 64
  %v315 = vpop.permute.xlu0 %314
  %v317 = vmul.f32 %v310, %v315
  %319 = vrot.lane.b32.xlu0 %v317, 32
  %v320 = vpop.permute.xlu0 %319
  %v322 = vadd.f32 %v312, %v320
  %v323 = vtanh.pop %v322
  %325 = vrot.lane.b32.xlu0 %v323, 64
  %v326 = vpop.permute.xlu0 %325
  %v328 = vmul.f32 %v310, %v326
  %s329 = scalar_lea.vmem [#allocation2], 4
  %v330 = vld [vmem:[%s329] sm:$0x3]
  %332 = vrot.lane.b32.xlu0 %v328, 32
  %v333 = vpop.permute.xlu0 %332
  %v334 = vsel %vm128, %v333, 0
  %336 = vmatprep.subr.mxu0 0.0
  %337 = vmatpush1.msra.mxu0 %v124
  %338 = vmatprep.subr.mxu0 0.0
  %339 = vmatpush1.msra.mxu0 %v125
  %340 = vmatprep.subr.mxu0 0.0
  %341 = vmatpush1.msra.mxu0 %v126
  %342 = vmatprep.subr.mxu0 0.0
  %343 = vmatpush1.msra.mxu0 %v127
  %344 = vmatprep.subr.mxu0 0.0
  %345 = vmatpush1.msra.mxu0 0.0
  %346 = vmatprep.subr.mxu0 0.0
  %347 = vmatpush1.msra.mxu0 0.0
  %348 = vmatprep.subr.mxu0 0.0
  %349 = vmatpush1.msra.mxu0 0.0
  %350 = vmatprep.subr.mxu0 0.0
  %351 = vmatpush1.msra.mxu0 0.0
  %352 = vmatprep.subr.mxu0 0.0
  %353 = vmatpush1.msra.mxu0 0.0
  %354 = vmatprep.subr.mxu0 0.0
  %355 = vmatpush1.msra.mxu0 0.0
  %356 = vmatprep.subr.mxu0 0.0
  %357 = vmatpush1.msra.mxu0 0.0
  %358 = vmatprep.subr.mxu0 0.0
  %359 = vmatpush1.msra.mxu0 0.0
  %360 = vmatprep.subr.mxu0 0.0
  %361 = vmatpush1.msra.mxu0 0.0
  %362 = vmatprep.subr.mxu0 0.0
  %363 = vmatpush1.msra.mxu0 0.0
  %364 = vmatprep.subr.mxu0 0.0
  %365 = vmatpush1.msra.mxu0 0.0
  %366 = vmatprep.subr.mxu0 0.0
  %367 = vmatpush1.msra.mxu0 0.0
  %368 = vmatprep.subr.mxu0 0.0
  %369 = vmatpush1.msra.mxu0 0.0
  %370 = vmatprep.subr.mxu0 0.0
  %371 = vmatpush1.msra.mxu0 0.0
  %372 = vmatprep.subr.mxu0 0.0
  %373 = vmatpush1.msra.mxu0 0.0
  %374 = vmatprep.subr.mxu0 0.0
  %375 = vmatpush1.msra.mxu0 0.0
  %376 = vmatprep.subr.mxu0 0.0
  %377 = vmatpush1.msra.mxu0 0.0
  %378 = vmatprep.subr.mxu0 0.0
  %379 = vmatpush1.msra.mxu0 0.0
  %380 = vmatprep.subr.mxu0 0.0
  %381 = vmatpush1.msra.mxu0 0.0
  %382 = vmatprep.subr.mxu0 0.0
  %383 = vmatpush1.msra.mxu0 0.0
  %384 = vmatprep.subr.mxu0 0.0
  %385 = vmatpush1.msra.mxu0 0.0
  %386 = vmatprep.subr.mxu0 0.0
  %387 = vmatpush1.msra.mxu0 0.0
  %388 = vmatprep.subr.mxu0 0.0
  %389 = vmatpush1.msra.mxu0 0.0
  %390 = vmatprep.subr.mxu0 0.0
  %391 = vmatpush1.msra.mxu0 0.0
  %392 = vmatprep.subr.mxu0 0.0
  %393 = vmatpush1.msra.mxu0 0.0
  %394 = vmatprep.subr.mxu0 0.0
  %395 = vmatpush1.msra.mxu0 0.0
  %396 = vmatprep.subr.mxu0 0.0
  %397 = vmatpush1.msra.mxu0 0.0
  %398 = vmatprep.subr.mxu0 0.0
  %399 = vmatpush1.msra.mxu0 0.0
  %400 = vmatprep.mubr.f32.mxu0 0.0
  %401 = vmatmul.mubr.f32.gmra.mrb[0].mxu0 %v334
  %v402 = vpop.f32.mrb[0].mxu0
  %v403 = vadd.f32 0.0, %v402
  %v404 = vpop.f32.mrb[0].mxu0
  %405 = vdwg.mxu0
  %v406 = vadd.f32 %v330, %v403
  %v407 = vxor.u32 %v406, 2147483648
  %v408 = vmul.f32 %v407, 1.442695
  %v409 = vpow.pop %v408
  %v410 = vadd.f32 %v409, 1.0
  %v411 = vrcp.pop %v410
  %v412 = vmul.f32 1.0, %v411
  %v413 = vtanh.pop %v406
  %v414 = vmul.f32 %v412, %v322
  %416 = vrot.lane.b32.xlu0 %v413, 64
  %v417 = vpop.permute.xlu0 %416
  %v419 = vmul.f32 %v412, %v417
  %421 = vrot.lane.b32.xlu0 %v419, 32
  %v422 = vpop.permute.xlu0 %421
  %v424 = vadd.f32 %v414, %v422
  %v425 = vtanh.pop %v424
  %427 = vrot.lane.b32.xlu0 %v425, 64
  %v428 = vpop.permute.xlu0 %427
  %v430 = vmul.f32 %v412, %v428
  %s431 = scalar_lea.vmem [#allocation2], 6
  %v432 = vld [vmem:[%s431] sm:$0x3]
  %434 = vrot.lane.b32.xlu0 %v430, 32
  %v435 = vpop.permute.xlu0 %434
  %v436 = vsel %vm128, %v435, 0
  %438 = vmatprep.subr.mxu0 0.0
  %439 = vmatpush1.msra.mxu0 %v124
  %440 = vmatprep.subr.mxu0 0.0
  %441 = vmatpush1.msra.mxu0 %v125
  %442 = vmatprep.subr.mxu0 0.0
  %443 = vmatpush1.msra.mxu0 %v126
  %444 = vmatprep.subr.mxu0 0.0
  %445 = vmatpush1.msra.mxu0 %v127
  %446 = vmatprep.subr.mxu0 0.0
  %447 = vmatpush1.msra.mxu0 0.0
  %448 = vmatprep.subr.mxu0 0.0
  %449 = vmatpush1.msra.mxu0 0.0
  %450 = vmatprep.subr.mxu0 0.0
  %451 = vmatpush1.msra.mxu0 0.0
  %452 = vmatprep.subr.mxu0 0.0
  %453 = vmatpush1.msra.mxu0 0.0
  %454 = vmatprep.subr.mxu0 0.0
  %455 = vmatpush1.msra.mxu0 0.0
  %456 = vmatprep.subr.mxu0 0.0
  %457 = vmatpush1.msra.mxu0 0.0
  %458 = vmatprep.subr.mxu0 0.0
  %459 = vmatpush1.msra.mxu0 0.0
  %460 = vmatprep.subr.mxu0 0.0
  %461 = vmatpush1.msra.mxu0 0.0
  %462 = vmatprep.subr.mxu0 0.0
  %463 = vmatpush1.msra.mxu0 0.0
  %464 = vmatprep.subr.mxu0 0.0
  %465 = vmatpush1.msra.mxu0 0.0
  %466 = vmatprep.subr.mxu0 0.0
  %467 = vmatpush1.msra.mxu0 0.0
  %468 = vmatprep.subr.mxu0 0.0
  %469 = vmatpush1.msra.mxu0 0.0
  %470 = vmatprep.subr.mxu0 0.0
  %471 = vmatpush1.msra.mxu0 0.0
  %472 = vmatprep.subr.mxu0 0.0
  %473 = vmatpush1.msra.mxu0 0.0
  %474 = vmatprep.subr.mxu0 0.0
  %475 = vmatpush1.msra.mxu0 0.0
  %476 = vmatprep.subr.mxu0 0.0
  %477 = vmatpush1.msra.mxu0 0.0
  %478 = vmatprep.subr.mxu0 0.0
  %479 = vmatpush1.msra.mxu0 0.0
  %480 = vmatprep.subr.mxu0 0.0
  %481 = vmatpush1.msra.mxu0 0.0
  %482 = vmatprep.subr.mxu0 0.0
  %483 = vmatpush1.msra.mxu0 0.0
  %484 = vmatprep.subr.mxu0 0.0
  %485 = vmatpush1.msra.mxu0 0.0
  %486 = vmatprep.subr.mxu0 0.0
  %487 = vmatpush1.msra.mxu0 0.0
  %488 = vmatprep.subr.mxu0 0.0
  %489 = vmatpush1.msra.mxu0 0.0
  %490 = vmatprep.subr.mxu0 0.0
  %491 = vmatpush1.msra.mxu0 0.0
  %492 = vmatprep.subr.mxu0 0.0
  %493 = vmatpush1.msra.mxu0 0.0
  %494 = vmatprep.subr.mxu0 0.0
  %495 = vmatpush1.msra.mxu0 0.0
  %496 = vmatprep.subr.mxu0 0.0
  %497 = vmatpush1.msra.mxu0 0.0
  %498 = vmatprep.subr.mxu0 0.0
  %499 = vmatpush1.msra.mxu0 0.0
  %500 = vmatprep.subr.mxu0 0.0
  %501 = vmatpush1.msra.mxu0 0.0
  %502 = vmatprep.mubr.f32.mxu0 0.0
  %503 = vmatmul.mubr.f32.gmra.mrb[0].mxu0 %v436
  %v504 = vpop.f32.mrb[0].mxu0
  %v505 = vadd.f32 0.0, %v504
  %v506 = vpop.f32.mrb[0].mxu0
  %507 = vdwg.mxu0
  %v508 = vadd.f32 %v432, %v505
  %v509 = vxor.u32 %v508, 2147483648
  %v510 = vmul.f32 %v509, 1.442695
  %v511 = vpow.pop %v510
  %v512 = vadd.f32 %v511, 1.0
  %v513 = vrcp.pop %v512
  %v514 = vmul.f32 1.0, %v513
  %v515 = vtanh.pop %v508
  %v516 = vmul.f32 %v514, %v424
  %518 = vrot.lane.b32.xlu0 %v515, 64
  %v519 = vpop.permute.xlu0 %518
  %v521 = vmul.f32 %v514, %v519
  %523 = vrot.lane.b32.xlu0 %v521, 32
  %v524 = vpop.permute.xlu0 %523
  %v526 = vadd.f32 %v516, %v524
  %v527 = vtanh.pop %v526
  %529 = vrot.lane.b32.xlu0 %v527, 64
  %v530 = vpop.permute.xlu0 %529
  %v532 = vmul.f32 %v514, %v530
  %s533 = scalar_lea.vmem [#allocation2], 8
  %v534 = vld [vmem:[%s533] sm:$0x3]
  %536 = vrot.lane.b32.xlu0 %v532, 32
  %v537 = vpop.permute.xlu0 %536
  %v538 = vsel %vm128, %v537, 0
  %540 = vmatprep.subr.mxu0 0.0
  %541 = vmatpush1.msra.mxu0 %v124
  %542 = vmatprep.subr.mxu0 0.0
  %543 = vmatpush1.msra.mxu0 %v125
  %544 = vmatprep.subr.mxu0 0.0
  %545 = vmatpush1.msra.mxu0 %v126
  %546 = vmatprep.subr.mxu0 0.0
  %547 = vmatpush1.msra.mxu0 %v127
  %548 = vmatprep.subr.mxu0 0.0
  %549 = vmatpush1.msra.mxu0 0.0
  %550 = vmatprep.subr.mxu0 0.0
  %551 = vmatpush1.msra.mxu0 0.0
  %552 = vmatprep.subr.mxu0 0.0
  %553 = vmatpush1.msra.mxu0 0.0
  %554 = vmatprep.subr.mxu0 0.0
  %555 = vmatpush1.msra.mxu0 0.0
  %556 = vmatprep.subr.mxu0 0.0
  %557 = vmatpush1.msra.mxu0 0.0
  %558 = vmatprep.subr.mxu0 0.0
  %559 = vmatpush1.msra.mxu0 0.0
  %560 = vmatprep.subr.mxu0 0.0
  %561 = vmatpush1.msra.mxu0 0.0
  %562 = vmatprep.subr.mxu0 0.0
  %563 = vmatpush1.msra.mxu0 0.0
  %564 = vmatprep.subr.mxu0 0.0
  %565 = vmatpush1.msra.mxu0 0.0
  %566 = vmatprep.subr.mxu0 0.0
  %567 = vmatpush1.msra.mxu0 0.0
  %568 = vmatprep.subr.mxu0 0.0
  %569 = vmatpush1.msra.mxu0 0.0
  %570 = vmatprep.subr.mxu0 0.0
  %571 = vmatpush1.msra.mxu0 0.0
  %572 = vmatprep.subr.mxu0 0.0
  %573 = vmatpush1.msra.mxu0 0.0
  %574 = vmatprep.subr.mxu0 0.0
  %575 = vmatpush1.msra.mxu0 0.0
  %576 = vmatprep.subr.mxu0 0.0
  %577 = vmatpush1.msra.mxu0 0.0
  %578 = vmatprep.subr.mxu0 0.0
  %579 = vmatpush1.msra.mxu0 0.0
  %580 = vmatprep.subr.mxu0 0.0
  %581 = vmatpush1.msra.mxu0 0.0
  %582 = vmatprep.subr.mxu0 0.0
  %583 = vmatpush1.msra.mxu0 0.0
  %584 = vmatprep.subr.mxu0 0.0
  %585 = vmatpush1.msra.mxu0 0.0
  %586 = vmatprep.subr.mxu0 0.0
  %587 = vmatpush1.msra.mxu0 0.0
  %588 = vmatprep.subr.mxu0 0.0
  %589 = vmatpush1.msra.mxu0 0.0
  %590 = vmatprep.subr.mxu0 0.0
  %591 = vmatpush1.msra.mxu0 0.0
  %592 = vmatprep.subr.mxu0 0.0
  %593 = vmatpush1.msra.mxu0 0.0
  %594 = vmatprep.subr.mxu0 0.0
  %595 = vmatpush1.msra.mxu0 0.0
  %596 = vmatprep.subr.mxu0 0.0
  %597 = vmatpush1.msra.mxu0 0.0
  %598 = vmatprep.subr.mxu0 0.0
  %599 = vmatpush1.msra.mxu0 0.0
  %600 = vmatprep.subr.mxu0 0.0
  %601 = vmatpush1.msra.mxu0 0.0
  %602 = vmatprep.subr.mxu0 0.0
  %603 = vmatpush1.msra.mxu0 0.0
  %604 = vmatprep.mubr.f32.mxu0 0.0
  %605 = vmatmul.mubr.f32.gmra.mrb[0].mxu0 %v538
  %v606 = vpop.f32.mrb[0].mxu0
  %v607 = vadd.f32 0.0, %v606
  %v608 = vpop.f32.mrb[0].mxu0
  %609 = vdwg.mxu0
  %v610 = vadd.f32 %v534, %v607
  %v611 = vxor.u32 %v610, 2147483648
  %v612 = vmul.f32 %v611, 1.442695
  %v613 = vpow.pop %v612
  %v614 = vadd.f32 %v613, 1.0
  %v615 = vrcp.pop %v614
  %v616 = vmul.f32 1.0, %v615
  %v617 = vtanh.pop %v610
  %v618 = vmul.f32 %v616, %v526
  %620 = vrot.lane.b32.xlu0 %v617, 64
  %v621 = vpop.permute.xlu0 %620
  %v623 = vmul.f32 %v616, %v621
  %625 = vrot.lane.b32.xlu0 %v623, 32
  %v626 = vpop.permute.xlu0 %625
  %v628 = vadd.f32 %v618, %v626
  %v629 = vtanh.pop %v628
  %631 = vrot.lane.b32.xlu0 %v629, 64
  %v632 = vpop.permute.xlu0 %631
  %v634 = vmul.f32 %v616, %v632
  %s635 = scalar_lea.vmem [#allocation2], 10
  %v636 = vld [vmem:[%s635] sm:$0x3]
  %638 = vrot.lane.b32.xlu0 %v634, 32
  %v639 = vpop.permute.xlu0 %638
  %v640 = vsel %vm128, %v639, 0
  %642 = vmatprep.subr.mxu0 0.0
  %643 = vmatpush1.msra.mxu0 %v124
  %644 = vmatprep.subr.mxu0 0.0
  %645 = vmatpush1.msra.mxu0 %v125
  %646 = vmatprep.subr.mxu0 0.0
  %647 = vmatpush1.msra.mxu0 %v126
  %648 = vmatprep.subr.mxu0 0.0
  %649 = vmatpush1.msra.mxu0 %v127
  %650 = vmatprep.subr.mxu0 0.0
  %651 = vmatpush1.msra.mxu0 0.0
  %652 = vmatprep.subr.mxu0 0.0
  %653 = vmatpush1.msra.mxu0 0.0
  %654 = vmatprep.subr.mxu0 0.0
  %655 = vmatpush1.msra.mxu0 0.0
  %656 = vmatprep.subr.mxu0 0.0
  %657 = vmatpush1.msra.mxu0 0.0
  %658 = vmatprep.subr.mxu0 0.0
  %659 = vmatpush1.msra.mxu0 0.0
  %660 = vmatprep.subr.mxu0 0.0
  %661 = vmatpush1.msra.mxu0 0.0
  %662 = vmatprep.subr.mxu0 0.0
  %663 = vmatpush1.msra.mxu0 0.0
  %664 = vmatprep.subr.mxu0 0.0
  %665 = vmatpush1.msra.mxu0 0.0
  %666 = vmatprep.subr.mxu0 0.0
  %667 = vmatpush1.msra.mxu0 0.0
  %668 = vmatprep.subr.mxu0 0.0
  %669 = vmatpush1.msra.mxu0 0.0
  %670 = vmatprep.subr.mxu0 0.0
  %671 = vmatpush1.msra.mxu0 0.0
  %672 = vmatprep.subr.mxu0 0.0
  %673 = vmatpush1.msra.mxu0 0.0
  %674 = vmatprep.subr.mxu0 0.0
  %675 = vmatpush1.msra.mxu0 0.0
  %676 = vmatprep.subr.mxu0 0.0
  %677 = vmatpush1.msra.mxu0 0.0
  %678 = vmatprep.subr.mxu0 0.0
  %679 = vmatpush1.msra.mxu0 0.0
  %680 = vmatprep.subr.mxu0 0.0
  %681 = vmatpush1.msra.mxu0 0.0
  %682 = vmatprep.subr.mxu0 0.0
  %683 = vmatpush1.msra.mxu0 0.0
  %684 = vmatprep.subr.mxu0 0.0
  %685 = vmatpush1.msra.mxu0 0.0
  %686 = vmatprep.subr.mxu0 0.0
  %687 = vmatpush1.msra.mxu0 0.0
  %688 = vmatprep.subr.mxu0 0.0
  %689 = vmatpush1.msra.mxu0 0.0
  %690 = vmatprep.subr.mxu0 0.0
  %691 = vmatpush1.msra.mxu0 0.0
  %692 = vmatprep.subr.mxu0 0.0
  %693 = vmatpush1.msra.mxu0 0.0
  %694 = vmatprep.subr.mxu0 0.0
  %695 = vmatpush1.msra.mxu0 0.0
  %696 = vmatprep.subr.mxu0 0.0
  %697 = vmatpush1.msra.mxu0 0.0
  %698 = vmatprep.subr.mxu0 0.0
  %699 = vmatpush1.msra.mxu0 0.0
  %700 = vmatprep.subr.mxu0 0.0
  %701 = vmatpush1.msra.mxu0 0.0
  %702 = vmatprep.subr.mxu0 0.0
  %703 = vmatpush1.msra.mxu0 0.0
  %704 = vmatprep.subr.mxu0 0.0
  %705 = vmatpush1.msra.mxu0 0.0
  %706 = vmatprep.mubr.f32.mxu0 0.0
  %707 = vmatmul.mubr.f32.gmra.mrb[0].mxu0 %v640
  %v708 = vpop.f32.mrb[0].mxu0
  %v709 = vadd.f32 0.0, %v708
  %v710 = vpop.f32.mrb[0].mxu0
  %711 = vdwg.mxu0
  %v712 = vadd.f32 %v636, %v709
  %v713 = vxor.u32 %v712, 2147483648
  %v714 = vmul.f32 %v713, 1.442695
  %v715 = vpow.pop %v714
  %v716 = vadd.f32 %v715, 1.0
  %v717 = vrcp.pop %v716
  %v718 = vmul.f32 1.0, %v717
  %v719 = vtanh.pop %v712
  %v720 = vmul.f32 %v718, %v628
  %722 = vrot.lane.b32.xlu0 %v719, 64
  %v723 = vpop.permute.xlu0 %722
  %v725 = vmul.f32 %v718, %v723
  %727 = vrot.lane.b32.xlu0 %v725, 32
  %v728 = vpop.permute.xlu0 %727
  %v730 = vadd.f32 %v720, %v728
  %v731 = vtanh.pop %v730
  %733 = vrot.lane.b32.xlu0 %v731, 64
  %v734 = vpop.permute.xlu0 %733
  %v736 = vmul.f32 %v718, %v734
  %s737 = scalar_lea.vmem [#allocation2], 12
  %v738 = vld [vmem:[%s737] sm:$0x3]
  %740 = vrot.lane.b32.xlu0 %v736, 32
  %v741 = vpop.permute.xlu0 %740
  %v742 = vsel %vm128, %v741, 0
  %744 = vmatprep.subr.mxu0 0.0
  %745 = vmatpush1.msra.mxu0 %v124
  %746 = vmatprep.subr.mxu0 0.0
  %747 = vmatpush1.msra.mxu0 %v125
  %748 = vmatprep.subr.mxu0 0.0
  %749 = vmatpush1.msra.mxu0 %v126
  %750 = vmatprep.subr.mxu0 0.0
  %751 = vmatpush1.msra.mxu0 %v127
  %752 = vmatprep.subr.mxu0 0.0
  %753 = vmatpush1.msra.mxu0 0.0
  %754 = vmatprep.subr.mxu0 0.0
  %755 = vmatpush1.msra.mxu0 0.0
  %756 = vmatprep.subr.mxu0 0.0
  %757 = vmatpush1.msra.mxu0 0.0
  %758 = vmatprep.subr.mxu0 0.0
  %759 = vmatpush1.msra.mxu0 0.0
  %760 = vmatprep.subr.mxu0 0.0
  %761 = vmatpush1.msra.mxu0 0.0
  %762 = vmatprep.subr.mxu0 0.0
  %763 = vmatpush1.msra.mxu0 0.0
  %764 = vmatprep.subr.mxu0 0.0
  %765 = vmatpush1.msra.mxu0 0.0
  %766 = vmatprep.subr.mxu0 0.0
  %767 = vmatpush1.msra.mxu0 0.0
  %768 = vmatprep.subr.mxu0 0.0
  %769 = vmatpush1.msra.mxu0 0.0
  %770 = vmatprep.subr.mxu0 0.0
  %771 = vmatpush1.msra.mxu0 0.0
  %772 = vmatprep.subr.mxu0 0.0
  %773 = vmatpush1.msra.mxu0 0.0
  %774 = vmatprep.subr.mxu0 0.0
  %775 = vmatpush1.msra.mxu0 0.0
  %776 = vmatprep.subr.mxu0 0.0
  %777 = vmatpush1.msra.mxu0 0.0
  %778 = vmatprep.subr.mxu0 0.0
  %779 = vmatpush1.msra.mxu0 0.0
  %780 = vmatprep.subr.mxu0 0.0
  %781 = vmatpush1.msra.mxu0 0.0
  %782 = vmatprep.subr.mxu0 0.0
  %783 = vmatpush1.msra.mxu0 0.0
  %784 = vmatprep.subr.mxu0 0.0
  %785 = vmatpush1.msra.mxu0 0.0
  %786 = vmatprep.subr.mxu0 0.0
  %787 = vmatpush1.msra.mxu0 0.0
  %788 = vmatprep.subr.mxu0 0.0
  %789 = vmatpush1.msra.mxu0 0.0
  %790 = vmatprep.subr.mxu0 0.0
  %791 = vmatpush1.msra.mxu0 0.0
  %792 = vmatprep.subr.mxu0 0.0
  %793 = vmatpush1.msra.mxu0 0.0
  %794 = vmatprep.subr.mxu0 0.0
  %795 = vmatpush1.msra.mxu0 0.0
  %796 = vmatprep.subr.mxu0 0.0
  %797 = vmatpush1.msra.mxu0 0.0
  %798 = vmatprep.subr.mxu0 0.0
  %799 = vmatpush1.msra.mxu0 0.0
  %800 = vmatprep.subr.mxu0 0.0
  %801 = vmatpush1.msra.mxu0 0.0
  %802 = vmatprep.subr.mxu0 0.0
  %803 = vmatpush1.msra.mxu0 0.0
  %804 = vmatprep.subr.mxu0 0.0
  %805 = vmatpush1.msra.mxu0 0.0
  %806 = vmatprep.subr.mxu0 0.0
  %807 = vmatpush1.msra.mxu0 0.0
  %808 = vmatprep.mubr.f32.mxu0 0.0
  %809 = vmatmul.mubr.f32.gmra.mrb[0].mxu0 %v742
  %v810 = vpop.f32.mrb[0].mxu0
  %v811 = vadd.f32 0.0, %v810
  %v812 = vpop.f32.mrb[0].mxu0
  %813 = vdwg.mxu0
  %v814 = vadd.f32 %v738, %v811
  %v815 = vxor.u32 %v814, 2147483648
  %v816 = vmul.f32 %v815, 1.442695
  %v817 = vpow.pop %v816
  %v818 = vadd.f32 %v817, 1.0
  %v819 = vrcp.pop %v818
  %v820 = vmul.f32 1.0, %v819
  %v821 = vtanh.pop %v814
  %v822 = vmul.f32 %v820, %v730
  %824 = vrot.lane.b32.xlu0 %v821, 64
  %v825 = vpop.permute.xlu0 %824
  %v827 = vmul.f32 %v820, %v825
  %829 = vrot.lane.b32.xlu0 %v827, 32
  %v830 = vpop.permute.xlu0 %829
  %v832 = vadd.f32 %v822, %v830
  %v833 = vtanh.pop %v832
  %835 = vrot.lane.b32.xlu0 %v833, 64
  %v836 = vpop.permute.xlu0 %835
  %v838 = vmul.f32 %v820, %v836
  %s839 = scalar_lea.vmem [#allocation2], 14
  %v840 = vld [vmem:[%s839] sm:$0x3]
  %842 = vrot.lane.b32.xlu0 %v838, 32
  %v843 = vpop.permute.xlu0 %842
  %v844 = vsel %vm128, %v843, 0
  %846 = vmatprep.subr.mxu0 0.0
  %847 = vmatpush1.msra.mxu0 %v124
  %848 = vmatprep.subr.mxu0 0.0
  %849 = vmatpush1.msra.mxu0 %v125
  %850 = vmatprep.subr.mxu0 0.0
  %851 = vmatpush1.msra.mxu0 %v126
  %852 = vmatprep.subr.mxu0 0.0
  %853 = vmatpush1.msra.mxu0 %v127
  %854 = vmatprep.subr.mxu0 0.0
  %855 = vmatpush1.msra.mxu0 0.0
  %856 = vmatprep.subr.mxu0 0.0
  %857 = vmatpush1.msra.mxu0 0.0
  %858 = vmatprep.subr.mxu0 0.0
  %859 = vmatpush1.msra.mxu0 0.0
  %860 = vmatprep.subr.mxu0 0.0
  %861 = vmatpush1.msra.mxu0 0.0
  %862 = vmatprep.subr.mxu0 0.0
  %863 = vmatpush1.msra.mxu0 0.0
  %864 = vmatprep.subr.mxu0 0.0
  %865 = vmatpush1.msra.mxu0 0.0
  %866 = vmatprep.subr.mxu0 0.0
  %867 = vmatpush1.msra.mxu0 0.0
  %868 = vmatprep.subr.mxu0 0.0
  %869 = vmatpush1.msra.mxu0 0.0
  %870 = vmatprep.subr.mxu0 0.0
  %871 = vmatpush1.msra.mxu0 0.0
  %872 = vmatprep.subr.mxu0 0.0
  %873 = vmatpush1.msra.mxu0 0.0
  %874 = vmatprep.subr.mxu0 0.0
  %875 = vmatpush1.msra.mxu0 0.0
  %876 = vmatprep.subr.mxu0 0.0
  %877 = vmatpush1.msra.mxu0 0.0
  %878 = vmatprep.subr.mxu0 0.0
  %879 = vmatpush1.msra.mxu0 0.0
  %880 = vmatprep.subr.mxu0 0.0
  %881 = vmatpush1.msra.mxu0 0.0
  %882 = vmatprep.subr.mxu0 0.0
  %883 = vmatpush1.msra.mxu0 0.0
  %884 = vmatprep.subr.mxu0 0.0
  %885 = vmatpush1.msra.mxu0 0.0
  %886 = vmatprep.subr.mxu0 0.0
  %887 = vmatpush1.msra.mxu0 0.0
  %888 = vmatprep.subr.mxu0 0.0
  %889 = vmatpush1.msra.mxu0 0.0
  %890 = vmatprep.subr.mxu0 0.0
  %891 = vmatpush1.msra.mxu0 0.0
  %892 = vmatprep.subr.mxu0 0.0
  %893 = vmatpush1.msra.mxu0 0.0
  %894 = vmatprep.subr.mxu0 0.0
  %895 = vmatpush1.msra.mxu0 0.0
  %896 = vmatprep.subr.mxu0 0.0
  %897 = vmatpush1.msra.mxu0 0.0
  %898 = vmatprep.subr.mxu0 0.0
  %899 = vmatpush1.msra.mxu0 0.0
  %900 = vmatprep.subr.mxu0 0.0
  %901 = vmatpush1.msra.mxu0 0.0
  %902 = vmatprep.subr.mxu0 0.0
  %903 = vmatpush1.msra.mxu0 0.0
  %904 = vmatprep.subr.mxu0 0.0
  %905 = vmatpush1.msra.mxu0 0.0
  %906 = vmatprep.subr.mxu0 0.0
  %907 = vmatpush1.msra.mxu0 0.0
  %908 = vmatprep.subr.mxu0 0.0
  %909 = vmatpush1.msra.mxu0 0.0
  %910 = vmatprep.mubr.f32.mxu0 0.0
  %911 = vmatmul.mubr.f32.gmra.mrb[0].mxu0 %v844
  %v912 = vpop.f32.mrb[0].mxu0
  %v913 = vadd.f32 0.0, %v912
  %v914 = vpop.f32.mrb[0].mxu0
  %915 = vdwg.mxu0
  %v916 = vadd.f32 %v840, %v913
  %v917 = vxor.u32 %v916, 2147483648
  %v918 = vmul.f32 %v917, 1.442695
  %v919 = vpow.pop %v918
  %v920 = vadd.f32 %v919, 1.0
  %v921 = vrcp.pop %v920
  %v922 = vmul.f32 1.0, %v921
  %v923 = vtanh.pop %v916
  %v924 = vmul.f32 %v922, %v832
  %926 = vrot.lane.b32.xlu0 %v923, 64
  %v927 = vpop.permute.xlu0 %926
  %v929 = vmul.f32 %v922, %v927
  %931 = vrot.lane.b32.xlu0 %v929, 32
  %v932 = vpop.permute.xlu0 %931
  %v934 = vadd.f32 %v924, %v932
  %v935 = vtanh.pop %v934
  %937 = vrot.lane.b32.xlu0 %v935, 64
  %v938 = vpop.permute.xlu0 %937
  %v940 = vmul.f32 %v922, %v938
  %v941 = vld [vmem:[%s4] sm:$0x1]
  %v943 = vlaneseq
  %v944 = vshrl.u32 %v943, 7
  %v945 = vsub.s32 0, %v944
  %v946 = vrot.slane %v941, %v945
  %947 = vrot.lane.b32.xlu0 %v946, 96
  %v948 = vpop.permute.xlu0 %947
  %v950 = vmul.f32 %v940, %v948
  %952 = vrot.lane.b32.xlu0 %v950, 32
  %v953 = vpop.permute.xlu0 %952
  %vm955 = vcmask 254976
  %v956 = vsel %vm955, %v953, 0.0
  %957 = vadd.xlane.f32.xlu0 %v956
  %v958 = vpop.xlane.xlu0 %957
  %v959 = vld [vmem:[#allocation3] sm:$0x1]
  %v961 = vlaneseq
  %v962 = vshrl.u32 %v961, 7
  %v963 = vsub.s32 0, %v962
  %v964 = vrot.slane %v959, %v963
  %v966 = vadd.f32 %v958, %v964
  %v967 = vxor.u32 %v966, 2147483648
  %v968 = vmul.f32 %v967, 1.442695
  %v969 = vpow.pop %v968
  %v970 = vadd.f32 %v969, 1.0
  %v971 = vrcp.pop %v970
  %v972 = vmul.f32 1.0, %v971
  %vm973 = vcmask 1024
  %974 = vst.msk [vmem:[%s6] sm:$0x3] %vm973, %v972
  // Predicated region
  $region26: #{lstm_cell_forward.1} parent=0 // pred_check
    _
  $region27: #{lstm_cell_forward.1} parent=0 // pred_check_branch
    %976 = sbr.rel (0) target = $region29
  $region28: #{lstm_cell_forward.1} parent=0 // pred_region
    _
  $region29: #{lstm_cell_forward.1} parent=0 // pred_fallthru
    _
  // Predicated region
  $region30: #{lstm_cell_forward.1} parent=0 // pred_check
    _
  $region31: #{lstm_cell_forward.1} parent=0 // pred_check_branch
    %978 = sbr.rel (0) target = $region33
  $region32: #{lstm_cell_forward.1} parent=0 // pred_region
    _
  $region33: #{lstm_cell_forward.1} parent=0 // pred_fallthru
    _

</llo_original>
